<compile_context>
chip_gen: v5e
topology: v5e:2x2
jax: 0.10.0
libtpu: 0.0.40
codegen_flags: <defaults>
</compile_context>

<pallas_src>
import functools

import jax
import jax.numpy as jnp
from jax.experimental import pallas as pl
from jax.experimental.pallas import tpu as pltpu


TIME_EMB_DIM = 16
TIME_HIDDEN = 32
LEVEL_CHANNELS = (8, 16, 32)   # FPN output channels per level
_HI = jax.lax.Precision.HIGHEST


# ----------------------------------------------------------------------------
# Synthetic diffusion schedule + backbone parameters (deterministic init)
# ----------------------------------------------------------------------------
def make_diffusion_schedule(num_timesteps=10):
    betas = jnp.linspace(1e-4, 2e-2, num_timesteps, dtype=jnp.float32)
    alphas_cumprod = jnp.cumprod(1.0 - betas)
    return jnp.sqrt(alphas_cumprod), jnp.sqrt(1.0 - alphas_cumprod)


def make_backbone_params(in_channels, key):
    # TODO(synk): checkpoint loading (`init_from_ckpt` / torch.load) has no Pallas
    # equivalent; parameters are initialized deterministically in-script instead.
    params = {}
    k = key

    def nxt():
        nonlocal k
        k, sub = jax.random.split(k)
        return sub

    params["time_w1"] = 0.1 * jax.random.normal(nxt(), (TIME_EMB_DIM, TIME_HIDDEN), jnp.float32)
    params["time_b1"] = jnp.zeros((TIME_HIDDEN,), jnp.float32)
    cin = in_channels
    for lvl, cout in enumerate(LEVEL_CHANNELS):
        params[f"w{lvl}"] = 0.2 * jax.random.normal(nxt(), (cin, cout), jnp.float32)
        params[f"b{lvl}"] = 0.05 * jax.random.normal(nxt(), (1, cout), jnp.float32)
        params[f"ts_w{lvl}"] = 0.1 * jax.random.normal(nxt(), (TIME_HIDDEN, cout), jnp.float32)
        params[f"ts_b{lvl}"] = jnp.zeros((cout,), jnp.float32)
        cin = cout
    return params


def sinusoidal_embedding(t_batch, dim):
    half = dim // 2
    freqs = jnp.exp(-jnp.log(10000.0) * jnp.arange(half, dtype=jnp.float32) / (half - 1))
    args = t_batch.astype(jnp.float32)[:, None] * freqs[None, :]
    return jnp.concatenate([jnp.sin(args), jnp.cos(args)], axis=-1)  # (T, dim)


def time_conditioning(params, times):
    """Time-embedding MLP -> per-level per-channel shift. Returns list of (T, Cl)."""
    t_arr = jnp.asarray(times, jnp.float32)
    temb = sinusoidal_embedding(t_arr, TIME_EMB_DIM)
    temb = jax.nn.silu(jnp.dot(temb, params["time_w1"], precision=_HI) + params["time_b1"])
    return [jnp.dot(temb, params[f"ts_w{l}"], precision=_HI) + params[f"ts_b{l}"]
            for l in range(len(LEVEL_CHANNELS))]


def make_pool_matrix_batched(B, H, W):
    """Block-diagonal (B*H*W, B*(H/2)*(W/2)) matrix: x_flat @ P == per-image 2x2 avg-pool."""
    M0, M1 = H * W, (H // 2) * (W // 2)
    r = jnp.arange(B * M0)
    b, m = r // M0, r % M0
    h, w = m // W, m % W
    cols = b * M1 + (h // 2) * (W // 2) + (w // 2)
    return (cols[:, None] == jnp.arange(B * M1)[None, :]).astype(jnp.float32) * 0.25


def build_derived(params, times, B, H, W):
    """Pre-transposed weights, per-timestep effective biases, block-diag pool matrices."""
    T = len(times)
    shifts = time_conditioning(params, times)
    wT, beff = [], []
    for lvl in range(len(LEVEL_CHANNELS)):
        beff.append((shifts[lvl] + params[f"b{lvl}"]).reshape(T, -1, 1).astype(jnp.float32))
        wT.append(jnp.asarray(params[f"w{lvl}"].T, jnp.float32))      # (Cl, Cin_l)
    pools = [make_pool_matrix_batched(B, H, W),
             make_pool_matrix_batched(B, H // 2, W // 2)]
    return wT, beff, pools


# ----------------------------------------------------------------------------
# Fused Pallas kernel: one timestep per program, full batch folded into lanes
# ----------------------------------------------------------------------------
def _fused_backbone_kernel(qcoef_ref,                   # (T, 2, 1)   resident
                           x_ref,                       # (C, B*M0)   resident image
                           noise_ref,                   # (1, C, B*M0) per-timestep noise
                           w0_ref, b0_ref, p0_ref,      # (C0,C) (T,C0,1) (B*M0,B*M1)
                           w1_ref, b1_ref, p1_ref,      # (C1,C0) (T,C1,1) (B*M1,B*M2)
                           w2_ref, b2_ref,              # (C2,C1) (T,C2,1)
                           o0_ref, o1_ref, o2_ref):
    ti = pl.program_id(0)

    # ---- q_sample: x_t = sqrt(ac[t])*x0 + sqrt(1-ac[t])*noise ---------------
    qc = qcoef_ref[ti]                                   # (2, 1)
    a = qc[0:1, :]                                       # (1, 1) broadcast
    b = qc[1:2, :]
    xt = a * x_ref[...] + b * noise_ref[0]               # (C, B*M0)

    # ---- level 0: relu(W0^T @ x_t + b0_eff) -> (C0, B*M0), 512 lanes --------
    y0 = jnp.dot(w0_ref[...], xt, preferred_element_type=jnp.float32) + b0_ref[ti]
    y0 = jnp.maximum(y0, 0.0)
    o0_ref[0] = y0

    # 2x avg pool as matmul with the block-diagonal pooling matrix
    x1 = jnp.dot(y0, p0_ref[...], preferred_element_type=jnp.float32)   # (C0, B*M1)

    # ---- level 1 -> (C1, B*M1), 128 lanes ------------------------------------
    y1 = jnp.dot(w1_ref[...], x1, preferred_element_type=jnp.float32) + b1_ref[ti]
    y1 = jnp.maximum(y1, 0.0)
    o1_ref[0] = y1

    x2 = jnp.dot(y1, p1_ref[...], preferred_element_type=jnp.float32)   # (C1, B*M2)

    # ---- level 2 -> (C2, B*M2) (tiny tile; masked store acceptable) ---------
    y2 = jnp.dot(w2_ref[...], x2, preferred_element_type=jnp.float32) + b2_ref[ti]
    y2 = jnp.maximum(y2, 0.0)
    o2_ref[0] = y2


# ----------------------------------------------------------------------------
# Backbone.forward equivalent (single fused pallas_call over a (T,) grid)
# ----------------------------------------------------------------------------
@functools.partial(jax.jit, static_argnames=("times",))
def backbone_module_forward(image_nchw, times, params, sqrt_ac, sqrt_om, noise):
    B, C, H, W = image_nchw.shape
    T = len(times)
    C0, C1, C2 = LEVEL_CHANNELS
    H1, W1 = H // 2, W // 2
    H2, W2 = H1 // 2, W1 // 2
    M0, M1, M2 = H * W, H1 * W1, H2 * W2

    wT, beff, pools = build_derived(params, times, B, H, W)

    t_idx = jnp.asarray(times, jnp.int32)
    qcoef = jnp.stack([sqrt_ac[t_idx], sqrt_om[t_idx]], axis=1).astype(jnp.float32)
    qcoef = qcoef.reshape(T, 2, 1)

    # NCHW -> channels on sublanes, (batch, spatial) folded into lanes: (C, B*M0)
    x_k = image_nchw.reshape(B, C, M0).transpose(1, 0, 2).reshape(C, B * M0)
    noise_k = noise.reshape(T, B, C, M0).transpose(0, 2, 1, 3).reshape(T, C, B * M0)

    def _res2(shape):   # resident 2-D block (fetched once)
        return pl.BlockSpec(shape, lambda t: (0, 0))

    def _res3(shape):   # resident 3-D block (indexed with program_id in-kernel)
        return pl.BlockSpec(shape, lambda t: (0, 0, 0))

    in_specs = [
        _res3((T, 2, 1)),                                     # qcoef
        _res2((C, B * M0)),                                   # image (resident, one DMA)
        pl.BlockSpec((1, C, B * M0), lambda t: (t, 0, 0)),    # per-timestep noise
        _res2((C0, C)),  _res3((T, C0, 1)), _res2((B * M0, B * M1)),   # level 0 + pool0
        _res2((C1, C0)), _res3((T, C1, 1)), _res2((B * M1, B * M2)),   # level 1 + pool1
        _res2((C2, C1)), _res3((T, C2, 1)),                            # level 2
    ]
    out_specs = (
        pl.BlockSpec((1, C0, B * M0), lambda t: (t, 0, 0)),   # lane-dense (512)
        pl.BlockSpec((1, C1, B * M1), lambda t: (t, 0, 0)),   # lane-dense (128)
        pl.BlockSpec((1, C2, B * M2), lambda t: (t, 0, 0)),   # tiny (32 lanes)
    )

    o0, o1, o2 = pl.pallas_call(
        _fused_backbone_kernel,
        out_shape=(
            jax.ShapeDtypeStruct((T, C0, B * M0), jnp.float32),
            jax.ShapeDtypeStruct((T, C1, B * M1), jnp.float32),
            jax.ShapeDtypeStruct((T, C2, B * M2), jnp.float32),
        ),
        grid=(T,),
        in_specs=in_specs,
        out_specs=out_specs,
        compiler_params=pltpu.CompilerParams(
            dimension_semantics=("parallel",)),   # 2 timesteps -> both TCs on v7x
    )(qcoef, x_k, noise_k,
      wT[0], beff[0], pools[0],
      wT[1], beff[1], pools[1],
      wT[2], beff[2])

    # (T, Cl, B*Ml) -> (B, T*Cl, Hl, Wl): channel-concat over `times`, NCHW restored.
    def unfold(o, Cl, Hl, Wl):
        Ml = Hl * Wl
        o = o.reshape(T, Cl, B, Ml).transpose(2, 0, 1, 3)   # (B, T, Cl, Ml)
        return o.reshape(B, T * Cl, Hl, Wl)

    emb0 = unfold(o0, C0, H, W)
    emb1 = unfold(o1, C1, H1, W1)
    emb2 = unfold(o2, C2, H2, W2)
    return [emb2, emb1, emb0]      # reversed level order, as in the torch module


# ----------------------------------------------------------------------------
# Pure-JAX reference (same noise) for correctness checking
# ----------------------------------------------------------------------------
def reference_forward(image, noise, params, times, sqrt_ac, sqrt_om):
    shifts = time_conditioning(params, times)
    embeddings = []
    for i, t in enumerate(times):
        x = sqrt_ac[t] * image + sqrt_om[t] * noise[i]                  # q_sample
        fpn = []
        for lvl in range(len(LEVEL_CHANNELS)):
            bias = (params[f"b{lvl}"][0] + shifts[lvl][i]).reshape(1, -1, 1, 1)
            y = jnp.einsum("bchw,co->bohw", x, params[f"w{lvl}"], precision=_HI) + bias
            y = jnp.maximum(y, 0.0)
            fpn.append(y)
            if lvl + 1 < len(LEVEL_CHANNELS):
                Bz, Cz, Hz, Wz = y.shape
                x = y.reshape(Bz, Cz, Hz // 2, 2, Wz // 2, 2).mean(axis=(3, 5))
        if not embeddings:
            embeddings = list(fpn)
        else:
            embeddings = [jnp.concatenate((e, f), axis=1) for e, f in zip(embeddings, fpn)]
    return list(reversed(embeddings))


# ----------------------------------------------------------------------------
if __name__ == "__main__":
    B, C, H, W = 2, 4, 16, 16
    times = (2, 7)

    key = jax.random.PRNGKey(0)
    k_img, k_params, k_noise = jax.random.split(key, 3)

    image = jax.random.normal(k_img, (B, C, H, W), jnp.float32)          # NCHW input
    params = make_backbone_params(C, k_params)
    sqrt_ac, sqrt_om = make_diffusion_schedule(num_timesteps=10)
    noise = jax.random.normal(k_noise, (len(times), B, C, H, W), jnp.float32)

    outputs = backbone_module_forward(image, times, params, sqrt_ac, sqrt_om, noise)
    outputs = [jax.block_until_ready(o) for o in outputs]

    # Expected (reversed levels, channel-concat over len(times)=2):
    #   (2, 64, 4, 4), (2, 32, 8, 8), (2, 16, 16, 16)
    expected = [(B, 2 * LEVEL_CHANNELS[2], 4, 4),
                (B, 2 * LEVEL_CHANNELS[1], 8, 8),
                (B, 2 * LEVEL_CHANNELS[0], 16, 16)]
    assert [tuple(o.shape) for o in outputs] == expected, [tuple(o.shape) for o in outputs]
    assert all(bool(jnp.all(jnp.isfinite(o))) for o in outputs)

    # Full-pipeline check (q_sample + 3 levels + pooling + concat) against pure JAX.
    refs = reference_forward(image, noise, params, times, sqrt_ac, sqrt_om)
    for o, r in zip(outputs, refs):
        err = float(jnp.max(jnp.abs(o - r)) / (jnp.max(jnp.abs(r)) + 1e-6))
        assert err < 1e-4, err

    print("KERNEL_OK")
</pallas_src>

<mosaic_0001>
module attributes {stable_mosaic.version = 11 : i64} {
  func.func @_fused_backbone_kernel(%arg0: i32, %arg1: memref<2x2x1xf32, #tpu.memory_space<vmem>>, %arg2: memref<4x512xf32, #tpu.memory_space<vmem>>, %arg3: memref<1x4x512xf32, #tpu.memory_space<vmem>>, %arg4: memref<8x4xf32, #tpu.memory_space<vmem>>, %arg5: memref<2x8x1xf32, #tpu.memory_space<vmem>>, %arg6: memref<512x128xf32, #tpu.memory_space<vmem>>, %arg7: memref<16x8xf32, #tpu.memory_space<vmem>>, %arg8: memref<2x16x1xf32, #tpu.memory_space<vmem>>, %arg9: memref<128x32xf32, #tpu.memory_space<vmem>>, %arg10: memref<32x16xf32, #tpu.memory_space<vmem>>, %arg11: memref<2x32x1xf32, #tpu.memory_space<vmem>>, %arg12: memref<1x8x512xf32, #tpu.memory_space<vmem>>, %arg13: memref<1x16x128xf32, #tpu.memory_space<vmem>>, %arg14: memref<1x32x32xf32, #tpu.memory_space<vmem>>) attributes {dimension_semantics = [#tpu.dimension_semantics<parallel>], iteration_bounds = array<i64: 2>, scalar_prefetch = 0 : i64, scratch_operands = 0 : i64, tpu.core_type = #tpu.core_type<tc>, window_params = [{pipeline_mode = #tpu.pipeline_mode<synchronous>, transform_indices = @transform_0, window_bounds = array<i64: 2, 2, 1>}, {pipeline_mode = #tpu.pipeline_mode<synchronous>, transform_indices = @transform_1, window_bounds = array<i64: 4, 512>}, {transform_indices = @transform_2, window_bounds = array<i64: 1, 4, 512>}, {pipeline_mode = #tpu.pipeline_mode<synchronous>, transform_indices = @transform_3, window_bounds = array<i64: 8, 4>}, {pipeline_mode = #tpu.pipeline_mode<synchronous>, transform_indices = @transform_4, window_bounds = array<i64: 2, 8, 1>}, {pipeline_mode = #tpu.pipeline_mode<synchronous>, transform_indices = @transform_5, window_bounds = array<i64: 512, 128>}, {pipeline_mode = #tpu.pipeline_mode<synchronous>, transform_indices = @transform_6, window_bounds = array<i64: 16, 8>}, {pipeline_mode = #tpu.pipeline_mode<synchronous>, transform_indices = @transform_7, window_bounds = array<i64: 2, 16, 1>}, {pipeline_mode = #tpu.pipeline_mode<synchronous>, transform_indices = @transform_8, window_bounds = array<i64: 128, 32>}, {pipeline_mode = #tpu.pipeline_mode<synchronous>, transform_indices = @transform_9, window_bounds = array<i64: 32, 16>}, {pipeline_mode = #tpu.pipeline_mode<synchronous>, transform_indices = @transform_10, window_bounds = array<i64: 2, 32, 1>}, {transform_indices = @transform_11, window_bounds = array<i64: 1, 8, 512>}, {transform_indices = @transform_12, window_bounds = array<i64: 1, 16, 128>}, {transform_indices = @transform_13, window_bounds = array<i64: 1, 32, 32>}]} {
    %0 = arith.index_cast %arg0 : i32 to index
    %c0 = arith.constant 0 : index
    %c0_0 = arith.constant 0 : index
    %1 = vector.load %arg1[%0, %c0, %c0_0] : memref<2x2x1xf32, #tpu.memory_space<vmem>>, vector<1x2x1xf32>
    %2 = vector.shape_cast %1 : vector<1x2x1xf32> to vector<2x1xf32>
    %3 = vector.extract_strided_slice %2 {offsets = [0, 0], sizes = [1, 1], strides = [1, 1]} : vector<2x1xf32> to vector<1x1xf32>
    %4 = vector.extract_strided_slice %2 {offsets = [1, 0], sizes = [1, 1], strides = [1, 1]} : vector<2x1xf32> to vector<1x1xf32>
    %c0_1 = arith.constant 0 : index
    %c0_2 = arith.constant 0 : index
    %5 = vector.load %arg2[%c0_1, %c0_2] : memref<4x512xf32, #tpu.memory_space<vmem>>, vector<4x512xf32>
    %6 = vector.broadcast %3 : vector<1x1xf32> to vector<4x512xf32>
    %7 = arith.mulf %6, %5 : vector<4x512xf32>
    %c0_3 = arith.constant 0 : index
    %c0_4 = arith.constant 0 : index
    %c0_5 = arith.constant 0 : index
    %8 = vector.load %arg3[%c0_3, %c0_4, %c0_5] : memref<1x4x512xf32, #tpu.memory_space<vmem>>, vector<1x4x512xf32>
    %9 = vector.shape_cast %8 : vector<1x4x512xf32> to vector<4x512xf32>
    %10 = vector.broadcast %4 : vector<1x1xf32> to vector<4x512xf32>
    %11 = arith.mulf %10, %9 : vector<4x512xf32>
    %12 = arith.addf %7, %11 : vector<4x512xf32>
    %c0_6 = arith.constant 0 : index
    %c0_7 = arith.constant 0 : index
    %13 = vector.load %arg4[%c0_6, %c0_7] : memref<8x4xf32, #tpu.memory_space<vmem>>, vector<8x4xf32>
    %cst = arith.constant dense<0.000000e+00> : vector<8x512xf32>
    %14 = tpu.matmul %13, %12, %cst {dimension_numbers = #tpu.dot_dimension_numbers<[1], [0], [0], [1], [0, 0, 1, 1], [], []>} : vector<8x4xf32>, vector<4x512xf32>, vector<8x512xf32> -> vector<8x512xf32>
    %15 = arith.index_cast %arg0 : i32 to index
    %c0_8 = arith.constant 0 : index
    %c0_9 = arith.constant 0 : index
    %16 = vector.load %arg5[%15, %c0_8, %c0_9] : memref<2x8x1xf32, #tpu.memory_space<vmem>>, vector<1x8x1xf32>
    %17 = vector.shape_cast %16 : vector<1x8x1xf32> to vector<8x1xf32>
    %18 = vector.broadcast %17 : vector<8x1xf32> to vector<8x512xf32>
    %19 = arith.addf %14, %18 : vector<8x512xf32>
    %cst_10 = arith.constant 0.000000e+00 : f32
    %20 = vector.broadcast %cst_10 : f32 to vector<8x512xf32>
    %21 = arith.maximumf %19, %20 : vector<8x512xf32>
    %c0_11 = arith.constant 0 : index
    %c0_12 = arith.constant 0 : index
    %c0_13 = arith.constant 0 : index
    %22 = vector.load %arg12[%c0_11, %c0_12, %c0_13] : memref<1x8x512xf32, #tpu.memory_space<vmem>>, vector<1x8x512xf32>
    %23 = vector.shape_cast %22 : vector<1x8x512xf32> to vector<8x512xf32>
    %24 = vector.shape_cast %21 : vector<8x512xf32> to vector<1x8x512xf32>
    tpu.vector_store %arg12[%c0_11, %c0_12, %c0_13], %24 {strides = array<i32>} : memref<1x8x512xf32, #tpu.memory_space<vmem>>, vector<1x8x512xf32>,
    %c0_14 = arith.constant 0 : index
    %c0_15 = arith.constant 0 : index
    %25 = vector.load %arg6[%c0_14, %c0_15] : memref<512x128xf32, #tpu.memory_space<vmem>>, vector<512x128xf32>
    %cst_16 = arith.constant dense<0.000000e+00> : vector<8x128xf32>
    %26 = tpu.matmul %21, %25, %cst_16 {dimension_numbers = #tpu.dot_dimension_numbers<[1], [0], [0], [1], [0, 0, 1, 1], [], []>} : vector<8x512xf32>, vector<512x128xf32>, vector<8x128xf32> -> vector<8x128xf32>
    %c0_17 = arith.constant 0 : index
    %c0_18 = arith.constant 0 : index
    %27 = vector.load %arg7[%c0_17, %c0_18] : memref<16x8xf32, #tpu.memory_space<vmem>>, vector<16x8xf32>
    %cst_19 = arith.constant dense<0.000000e+00> : vector<16x128xf32>
    %28 = tpu.matmul %27, %26, %cst_19 {dimension_numbers = #tpu.dot_dimension_numbers<[1], [0], [0], [1], [0, 0, 1, 1], [], []>} : vector<16x8xf32>, vector<8x128xf32>, vector<16x128xf32> -> vector<16x128xf32>
    %29 = arith.index_cast %arg0 : i32 to index
    %c0_20 = arith.constant 0 : index
    %c0_21 = arith.constant 0 : index
    %30 = vector.load %arg8[%29, %c0_20, %c0_21] : memref<2x16x1xf32, #tpu.memory_space<vmem>>, vector<1x16x1xf32>
    %31 = vector.shape_cast %30 : vector<1x16x1xf32> to vector<16x1xf32>
    %32 = vector.broadcast %31 : vector<16x1xf32> to vector<16x128xf32>
    %33 = arith.addf %28, %32 : vector<16x128xf32>
    %cst_22 = arith.constant 0.000000e+00 : f32
    %34 = vector.broadcast %cst_22 : f32 to vector<16x128xf32>
    %35 = arith.maximumf %33, %34 : vector<16x128xf32>
    %c0_23 = arith.constant 0 : index
    %c0_24 = arith.constant 0 : index
    %c0_25 = arith.constant 0 : index
    %36 = vector.load %arg13[%c0_23, %c0_24, %c0_25] : memref<1x16x128xf32, #tpu.memory_space<vmem>>, vector<1x16x128xf32>
    %37 = vector.shape_cast %36 : vector<1x16x128xf32> to vector<16x128xf32>
    %38 = vector.shape_cast %35 : vector<16x128xf32> to vector<1x16x128xf32>
    tpu.vector_store %arg13[%c0_23, %c0_24, %c0_25], %38 {strides = array<i32>} : memref<1x16x128xf32, #tpu.memory_space<vmem>>, vector<1x16x128xf32>,
    %c0_26 = arith.constant 0 : index
    %c0_27 = arith.constant 0 : index
    %39 = vector.load %arg9[%c0_26, %c0_27] : memref<128x32xf32, #tpu.memory_space<vmem>>, vector<128x32xf32>
    %cst_28 = arith.constant dense<0.000000e+00> : vector<16x32xf32>
    %40 = tpu.matmul %35, %39, %cst_28 {dimension_numbers = #tpu.dot_dimension_numbers<[1], [0], [0], [1], [0, 0, 1, 1], [], []>} : vector<16x128xf32>, vector<128x32xf32>, vector<16x32xf32> -> vector<16x32xf32>
    %c0_29 = arith.constant 0 : index
    %c0_30 = arith.constant 0 : index
    %41 = vector.load %arg10[%c0_29, %c0_30] : memref<32x16xf32, #tpu.memory_space<vmem>>, vector<32x16xf32>
    %cst_31 = arith.constant dense<0.000000e+00> : vector<32x32xf32>
    %42 = tpu.matmul %41, %40, %cst_31 {dimension_numbers = #tpu.dot_dimension_numbers<[1], [0], [0], [1], [0, 0, 1, 1], [], []>} : vector<32x16xf32>, vector<16x32xf32>, vector<32x32xf32> -> vector<32x32xf32>
    %43 = arith.index_cast %arg0 : i32 to index
    %c0_32 = arith.constant 0 : index
    %c0_33 = arith.constant 0 : index
    %44 = vector.load %arg11[%43, %c0_32, %c0_33] : memref<2x32x1xf32, #tpu.memory_space<vmem>>, vector<1x32x1xf32>
    %45 = vector.shape_cast %44 : vector<1x32x1xf32> to vector<32x1xf32>
    %46 = vector.broadcast %45 : vector<32x1xf32> to vector<32x32xf32>
    %47 = arith.addf %42, %46 : vector<32x32xf32>
    %cst_34 = arith.constant 0.000000e+00 : f32
    %48 = vector.broadcast %cst_34 : f32 to vector<32x32xf32>
    %49 = arith.maximumf %47, %48 : vector<32x32xf32>
    %c0_35 = arith.constant 0 : index
    %c0_36 = arith.constant 0 : index
    %c0_37 = arith.constant 0 : index
    %50 = vector.load %arg14[%c0_35, %c0_36, %c0_37] : memref<1x32x32xf32, #tpu.memory_space<vmem>>, vector<1x32x32xf32>
    %51 = vector.shape_cast %50 : vector<1x32x32xf32> to vector<32x32xf32>
    %52 = vector.shape_cast %49 : vector<32x32xf32> to vector<1x32x32xf32>
    tpu.vector_store %arg14[%c0_35, %c0_36, %c0_37], %52 {strides = array<i32>} : memref<1x32x32xf32, #tpu.memory_space<vmem>>, vector<1x32x32xf32>,
    return
  }
  func.func @transform_0(%arg0: i32) -> (i32, i32, i32) {
    %c0_i32 = arith.constant 0 : i32
    %c0_i32_0 = arith.constant 0 : i32
    %c0_i32_1 = arith.constant 0 : i32
    %c0_i32_2 = arith.constant 0 : i32
    return %c0_i32, %c0_i32_0, %c0_i32_1 : i32, i32, i32
  }
  func.func @transform_1(%arg0: i32) -> (i32, i32) {
    %c0_i32 = arith.constant 0 : i32
    %c0_i32_0 = arith.constant 0 : i32
    %c0_i32_1 = arith.constant 0 : i32
    return %c0_i32, %c0_i32_0 : i32, i32
  }
  func.func @transform_2(%arg0: i32) -> (i32, i32, i32) {
    %c0_i32 = arith.constant 0 : i32
    %c0_i32_0 = arith.constant 0 : i32
    %c0_i32_1 = arith.constant 0 : i32
    return %arg0, %c0_i32, %c0_i32_0 : i32, i32, i32
  }
  func.func @transform_3(%arg0: i32) -> (i32, i32) {
    %c0_i32 = arith.constant 0 : i32
    %c0_i32_0 = arith.constant 0 : i32
    %c0_i32_1 = arith.constant 0 : i32
    return %c0_i32, %c0_i32_0 : i32, i32
  }
  func.func @transform_4(%arg0: i32) -> (i32, i32, i32) {
    %c0_i32 = arith.constant 0 : i32
    %c0_i32_0 = arith.constant 0 : i32
    %c0_i32_1 = arith.constant 0 : i32
    %c0_i32_2 = arith.constant 0 : i32
    return %c0_i32, %c0_i32_0, %c0_i32_1 : i32, i32, i32
  }
  func.func @transform_5(%arg0: i32) -> (i32, i32) {
    %c0_i32 = arith.constant 0 : i32
    %c0_i32_0 = arith.constant 0 : i32
    %c0_i32_1 = arith.constant 0 : i32
    return %c0_i32, %c0_i32_0 : i32, i32
  }
  func.func @transform_6(%arg0: i32) -> (i32, i32) {
    %c0_i32 = arith.constant 0 : i32
    %c0_i32_0 = arith.constant 0 : i32
    %c0_i32_1 = arith.constant 0 : i32
    return %c0_i32, %c0_i32_0 : i32, i32
  }
  func.func @transform_7(%arg0: i32) -> (i32, i32, i32) {
    %c0_i32 = arith.constant 0 : i32
    %c0_i32_0 = arith.constant 0 : i32
    %c0_i32_1 = arith.constant 0 : i32
    %c0_i32_2 = arith.constant 0 : i32
    return %c0_i32, %c0_i32_0, %c0_i32_1 : i32, i32, i32
  }
  func.func @transform_8(%arg0: i32) -> (i32, i32) {
    %c0_i32 = arith.constant 0 : i32
    %c0_i32_0 = arith.constant 0 : i32
    %c0_i32_1 = arith.constant 0 : i32
    return %c0_i32, %c0_i32_0 : i32, i32
  }
  func.func @transform_9(%arg0: i32) -> (i32, i32) {
    %c0_i32 = arith.constant 0 : i32
    %c0_i32_0 = arith.constant 0 : i32
    %c0_i32_1 = arith.constant 0 : i32
    return %c0_i32, %c0_i32_0 : i32, i32
  }
  func.func @transform_10(%arg0: i32) -> (i32, i32, i32) {
    %c0_i32 = arith.constant 0 : i32
    %c0_i32_0 = arith.constant 0 : i32
    %c0_i32_1 = arith.constant 0 : i32
    %c0_i32_2 = arith.constant 0 : i32
    return %c0_i32, %c0_i32_0, %c0_i32_1 : i32, i32, i32
  }
  func.func @transform_11(%arg0: i32) -> (i32, i32, i32) {
    %c0_i32 = arith.constant 0 : i32
    %c0_i32_0 = arith.constant 0 : i32
    %c0_i32_1 = arith.constant 0 : i32
    return %arg0, %c0_i32, %c0_i32_0 : i32, i32, i32
  }
  func.func @transform_12(%arg0: i32) -> (i32, i32, i32) {
    %c0_i32 = arith.constant 0 : i32
    %c0_i32_0 = arith.constant 0 : i32
    %c0_i32_1 = arith.constant 0 : i32
    return %arg0, %c0_i32, %c0_i32_0 : i32, i32, i32
  }
  func.func @transform_13(%arg0: i32) -> (i32, i32, i32) {
    %c0_i32 = arith.constant 0 : i32
    %c0_i32_0 = arith.constant 0 : i32
    %c0_i32_1 = arith.constant 0 : i32
    return %arg0, %c0_i32, %c0_i32_0 : i32, i32, i32
  }
}

</mosaic_0001>

<llo_original>
// kernel: backbone_module_forward.1
$region0: #{backbone_module_forward.1}
  #allocation0 [shape = 'u32[]', space=smem, size = 0x4, offset = 0x4, fixed_abs, tag = 'smem constant byte address 0x4 - core index']
  #allocation1 [shape = 'u32[72,128]{1,0:T(1,128)}', space=vmem, size = 0x9000, scoped, tag = 'internal scratch']
  %s0 = inlined_call_operand.vmem [shape: f32[2,2,1], index: 0, kind: input, shape index: {}]
  %s1 = inlined_call_operand.vmem [shape: f32[4,512], index: 1, kind: input, shape index: {}]
  %s2 = inlined_call_operand.vmem [shape: f32[2,4,512], index: 2, kind: input, shape index: {}]
  %s3 = inlined_call_operand.vmem [shape: f32[8,4], index: 3, kind: input, shape index: {}]
  %s4 = inlined_call_operand.vmem [shape: f32[2,8,1], index: 4, kind: input, shape index: {}]
  %s5 = inlined_call_operand.vmem [shape: f32[512,128], index: 5, kind: input, shape index: {}]
  %s6 = inlined_call_operand.vmem [shape: f32[16,8], index: 6, kind: input, shape index: {}]
  %s7 = inlined_call_operand.vmem [shape: f32[2,16,1], index: 7, kind: input, shape index: {}]
  %s8 = inlined_call_operand.vmem [shape: f32[128,32], index: 8, kind: input, shape index: {}]
  %s9 = inlined_call_operand.vmem [shape: f32[32,16], index: 9, kind: input, shape index: {}]
  %s10 = inlined_call_operand.vmem [shape: f32[2,32,1], index: 10, kind: input, shape index: {}]
  %s11 = inlined_call_operand.vmem [shape: f32[2,8,512], index: 11, kind: output, shape index: {0}]
  %s12 = inlined_call_operand.vmem [shape: f32[2,16,128], index: 12, kind: output, shape index: {1}]
  %s13 = inlined_call_operand.vmem [shape: f32[2,32,32], index: 13, kind: output, shape index: {2}]
  %14 = xla_tuple %s11, %s12, %s13
  %s15 = sld [smem:[#allocation0]]
  $region93: #{backbone_module_forward.1} parent=0
    _
  %s17 = ssub.s32 1, %s15
  %s18 = scalar_select 0, %s17, %s15
  loop: start=0, step=1, limit=4
  $region2: #{backbone_module_forward.1} parent=0 // loop_pre_header
    _
  $region3: #{backbone_module_forward.1} parent=0 // loop_header
    %s20 = sphi 0, %s24
    %p21 = scmp.ge.s32.totalorder %s20, 4
    %s28 = sphi 0, %s28
    %s30 = sphi 0, %s28
    %s31 = sphi 0, %s30
    %s45 = sphi 0, %s31
    %s49 = sphi 0, %s49
    %s51 = sphi 0, %s49
    %s52 = sphi 0, %s51
    %s66 = sphi 0, %s52
    %s72 = sphi 0, %s74
    %s75 = sphi 0, %s72
    %s76 = sphi 0, %s75
    %s92 = sphi 0, %s76
    %s96 = sphi 0, %s96
    %s98 = sphi 0, %s96
    %s99 = sphi 0, %s98
    %s113 = sphi 0, %s99
    %s117 = sphi 0, %s117
    %s119 = sphi 0, %s117
    %s120 = sphi 0, %s119
    %s134 = sphi 0, %s120
    %s138 = sphi 0, %s138
    %s140 = sphi 0, %s138
    %s141 = sphi 0, %s140
    %s155 = sphi 0, %s141
    %s159 = sphi 0, %s159
    %s161 = sphi 0, %s159
    %s162 = sphi 0, %s161
    %s176 = sphi 0, %s162
    %s180 = sphi 0, %s180
    %s182 = sphi 0, %s180
    %s183 = sphi 0, %s182
    %s197 = sphi 0, %s183
    %s201 = sphi 0, %s201
    %s203 = sphi 0, %s201
    %s204 = sphi 0, %s203
    %s218 = sphi 0, %s204
    %s222 = sphi 0, %s222
    %s224 = sphi 0, %s222
    %s225 = sphi 0, %s224
    %s239 = sphi 0, %s225
    %s243 = sphi 0, %s243
    %s245 = sphi 0, %s243
    %s246 = sphi 0, %s245
    %s260 = sphi 0, %s246
    %s266 = sphi 0, %s268
    %s269 = sphi 0, %s266
    %s270 = sphi 0, %s269
    %s286 = sphi 0, %s270
    %s292 = sphi 0, %s294
    %s295 = sphi 0, %s292
    %s296 = sphi 0, %s295
    %s312 = sphi 0, %s296
    %s318 = sphi 0, %s320
    %s321 = sphi 0, %s318
    %s322 = sphi 0, %s321
    %s338 = sphi 0, %s322
  $region4: #{backbone_module_forward.1} parent=0 // loop_header_branch
    %23 = sbr.rel (%p21) target = $region8
  $region5: #{backbone_module_forward.1} parent=0 // loop_body
    %s25 = ssub.s32 %s20, 1
    %s26 = ssub.s32 %s20, 2
    %s27 = sadd.s32 %s20, 1
    %s29 = sadd.s32 %s28, 1
    %p32 = scmp.eq.s32.totalorder %s20, 1
    %p33 = scmp.ne.s32.totalorder %s28, %s30
    %p34 = scmp.eq.s32.totalorder %s20, 0
    %p35 = por %p33, %p34
    %p36 = scmp.ne.s32.totalorder %s28, %s30
    %p37 = scmp.eq.s32.totalorder %s25, 1
    %p38 = por %p36, %p37
    %p39 = scmp.ne.s32.totalorder %s30, %s31
    %p40 = scmp.eq.s32.totalorder %s25, 0
    %p41 = por %p39, %p40
    %p42 = scmp.ne.s32.totalorder %s30, %s31
    %p43 = scmp.eq.s32.totalorder %s26, 1
    %p44 = por %p42, %p43
    %p46 = scmp.ne.s32.totalorder %s31, %s45
    %p47 = scmp.eq.s32.totalorder %s26, 0
    %p48 = por %p46, %p47
    %s50 = sadd.s32 %s49, 1
    %p53 = scmp.eq.s32.totalorder %s20, 1
    %p54 = scmp.ne.s32.totalorder %s49, %s51
    %p55 = scmp.eq.s32.totalorder %s20, 0
    %p56 = por %p54, %p55
    %p57 = scmp.ne.s32.totalorder %s49, %s51
    %p58 = scmp.eq.s32.totalorder %s25, 1
    %p59 = por %p57, %p58
    %p60 = scmp.ne.s32.totalorder %s51, %s52
    %p61 = scmp.eq.s32.totalorder %s25, 0
    %p62 = por %p60, %p61
    %p63 = scmp.ne.s32.totalorder %s51, %s52
    %p64 = scmp.eq.s32.totalorder %s26, 1
    %p65 = por %p63, %p64
    %p67 = scmp.ne.s32.totalorder %s52, %s66
    %p68 = scmp.eq.s32.totalorder %s26, 0
    %p69 = por %p67, %p68
    %s70 = ssub.s32 %s20, %s27
    %p71 = scmp.eq.s32.totalorder %s70, 0
    %s73 = sadd.s32 %s72, 1
    %s74 = scalar_select %p71, %s72, %s73
    %p77 = pneg %p71
    %p78 = scmp.eq.s32.totalorder %s20, 1
    %p79 = por %p77, %p78
    %p80 = scmp.ne.s32.totalorder %s72, %s75
    %p81 = scmp.eq.s32.totalorder %s20, 0
    %p82 = por %p80, %p81
    %p83 = scmp.ne.s32.totalorder %s72, %s75
    %p84 = scmp.eq.s32.totalorder %s25, 1
    %p85 = por %p83, %p84
    %p86 = scmp.ne.s32.totalorder %s75, %s76
    %p87 = scmp.eq.s32.totalorder %s25, 0
    %p88 = por %p86, %p87
    %p89 = scmp.ne.s32.totalorder %s75, %s76
    %p90 = scmp.eq.s32.totalorder %s26, 1
    %p91 = por %p89, %p90
    %p93 = scmp.ne.s32.totalorder %s76, %s92
    %p94 = scmp.eq.s32.totalorder %s26, 0
    %p95 = por %p93, %p94
    %s97 = sadd.s32 %s96, 1
    %p100 = scmp.eq.s32.totalorder %s20, 1
    %p101 = scmp.ne.s32.totalorder %s96, %s98
    %p102 = scmp.eq.s32.totalorder %s20, 0
    %p103 = por %p101, %p102
    %p104 = scmp.ne.s32.totalorder %s96, %s98
    %p105 = scmp.eq.s32.totalorder %s25, 1
    %p106 = por %p104, %p105
    %p107 = scmp.ne.s32.totalorder %s98, %s99
    %p108 = scmp.eq.s32.totalorder %s25, 0
    %p109 = por %p107, %p108
    %p110 = scmp.ne.s32.totalorder %s98, %s99
    %p111 = scmp.eq.s32.totalorder %s26, 1
    %p112 = por %p110, %p111
    %p114 = scmp.ne.s32.totalorder %s99, %s113
    %p115 = scmp.eq.s32.totalorder %s26, 0
    %p116 = por %p114, %p115
    %s118 = sadd.s32 %s117, 1
    %p121 = scmp.eq.s32.totalorder %s20, 1
    %p122 = scmp.ne.s32.totalorder %s117, %s119
    %p123 = scmp.eq.s32.totalorder %s20, 0
    %p124 = por %p122, %p123
    %p125 = scmp.ne.s32.totalorder %s117, %s119
    %p126 = scmp.eq.s32.totalorder %s25, 1
    %p127 = por %p125, %p126
    %p128 = scmp.ne.s32.totalorder %s119, %s120
    %p129 = scmp.eq.s32.totalorder %s25, 0
    %p130 = por %p128, %p129
    %p131 = scmp.ne.s32.totalorder %s119, %s120
    %p132 = scmp.eq.s32.totalorder %s26, 1
    %p133 = por %p131, %p132
    %p135 = scmp.ne.s32.totalorder %s120, %s134
    %p136 = scmp.eq.s32.totalorder %s26, 0
    %p137 = por %p135, %p136
    %s139 = sadd.s32 %s138, 1
    %p142 = scmp.eq.s32.totalorder %s20, 1
    %p143 = scmp.ne.s32.totalorder %s138, %s140
    %p144 = scmp.eq.s32.totalorder %s20, 0
    %p145 = por %p143, %p144
    %p146 = scmp.ne.s32.totalorder %s138, %s140
    %p147 = scmp.eq.s32.totalorder %s25, 1
    %p148 = por %p146, %p147
    %p149 = scmp.ne.s32.totalorder %s140, %s141
    %p150 = scmp.eq.s32.totalorder %s25, 0
    %p151 = por %p149, %p150
    %p152 = scmp.ne.s32.totalorder %s140, %s141
    %p153 = scmp.eq.s32.totalorder %s26, 1
    %p154 = por %p152, %p153
    %p156 = scmp.ne.s32.totalorder %s141, %s155
    %p157 = scmp.eq.s32.totalorder %s26, 0
    %p158 = por %p156, %p157
    %s160 = sadd.s32 %s159, 1
    %p163 = scmp.eq.s32.totalorder %s20, 1
    %p164 = scmp.ne.s32.totalorder %s159, %s161
    %p165 = scmp.eq.s32.totalorder %s20, 0
    %p166 = por %p164, %p165
    %p167 = scmp.ne.s32.totalorder %s159, %s161
    %p168 = scmp.eq.s32.totalorder %s25, 1
    %p169 = por %p167, %p168
    %p170 = scmp.ne.s32.totalorder %s161, %s162
    %p171 = scmp.eq.s32.totalorder %s25, 0
    %p172 = por %p170, %p171
    %p173 = scmp.ne.s32.totalorder %s161, %s162
    %p174 = scmp.eq.s32.totalorder %s26, 1
    %p175 = por %p173, %p174
    %p177 = scmp.ne.s32.totalorder %s162, %s176
    %p178 = scmp.eq.s32.totalorder %s26, 0
    %p179 = por %p177, %p178
    %s181 = sadd.s32 %s180, 1
    %p184 = scmp.eq.s32.totalorder %s20, 1
    %p185 = scmp.ne.s32.totalorder %s180, %s182
    %p186 = scmp.eq.s32.totalorder %s20, 0
    %p187 = por %p185, %p186
    %p188 = scmp.ne.s32.totalorder %s180, %s182
    %p189 = scmp.eq.s32.totalorder %s25, 1
    %p190 = por %p188, %p189
    %p191 = scmp.ne.s32.totalorder %s182, %s183
    %p192 = scmp.eq.s32.totalorder %s25, 0
    %p193 = por %p191, %p192
    %p194 = scmp.ne.s32.totalorder %s182, %s183
    %p195 = scmp.eq.s32.totalorder %s26, 1
    %p196 = por %p194, %p195
    %p198 = scmp.ne.s32.totalorder %s183, %s197
    %p199 = scmp.eq.s32.totalorder %s26, 0
    %p200 = por %p198, %p199
    %s202 = sadd.s32 %s201, 1
    %p205 = scmp.eq.s32.totalorder %s20, 1
    %p206 = scmp.ne.s32.totalorder %s201, %s203
    %p207 = scmp.eq.s32.totalorder %s20, 0
    %p208 = por %p206, %p207
    %p209 = scmp.ne.s32.totalorder %s201, %s203
    %p210 = scmp.eq.s32.totalorder %s25, 1
    %p211 = por %p209, %p210
    %p212 = scmp.ne.s32.totalorder %s203, %s204
    %p213 = scmp.eq.s32.totalorder %s25, 0
    %p214 = por %p212, %p213
    %p215 = scmp.ne.s32.totalorder %s203, %s204
    %p216 = scmp.eq.s32.totalorder %s26, 1
    %p217 = por %p215, %p216
    %p219 = scmp.ne.s32.totalorder %s204, %s218
    %p220 = scmp.eq.s32.totalorder %s26, 0
    %p221 = por %p219, %p220
    %s223 = sadd.s32 %s222, 1
    %p226 = scmp.eq.s32.totalorder %s20, 1
    %p227 = scmp.ne.s32.totalorder %s222, %s224
    %p228 = scmp.eq.s32.totalorder %s20, 0
    %p229 = por %p227, %p228
    %p230 = scmp.ne.s32.totalorder %s222, %s224
    %p231 = scmp.eq.s32.totalorder %s25, 1
    %p232 = por %p230, %p231
    %p233 = scmp.ne.s32.totalorder %s224, %s225
    %p234 = scmp.eq.s32.totalorder %s25, 0
    %p235 = por %p233, %p234
    %p236 = scmp.ne.s32.totalorder %s224, %s225
    %p237 = scmp.eq.s32.totalorder %s26, 1
    %p238 = por %p236, %p237
    %p240 = scmp.ne.s32.totalorder %s225, %s239
    %p241 = scmp.eq.s32.totalorder %s26, 0
    %p242 = por %p240, %p241
    %s244 = sadd.s32 %s243, 1
    %p247 = scmp.eq.s32.totalorder %s20, 1
    %p248 = scmp.ne.s32.totalorder %s243, %s245
    %p249 = scmp.eq.s32.totalorder %s20, 0
    %p250 = por %p248, %p249
    %p251 = scmp.ne.s32.totalorder %s243, %s245
    %p252 = scmp.eq.s32.totalorder %s25, 1
    %p253 = por %p251, %p252
    %p254 = scmp.ne.s32.totalorder %s245, %s246
    %p255 = scmp.eq.s32.totalorder %s25, 0
    %p256 = por %p254, %p255
    %p257 = scmp.ne.s32.totalorder %s245, %s246
    %p258 = scmp.eq.s32.totalorder %s26, 1
    %p259 = por %p257, %p258
    %p261 = scmp.ne.s32.totalorder %s246, %s260
    %p262 = scmp.eq.s32.totalorder %s26, 0
    %p263 = por %p261, %p262
    %s264 = ssub.s32 %s20, %s27
    %p265 = scmp.eq.s32.totalorder %s264, 0
    %s267 = sadd.s32 %s266, 1
    %s268 = scalar_select %p265, %s266, %s267
    %p271 = pneg %p265
    %p272 = scmp.eq.s32.totalorder %s20, 1
    %p273 = por %p271, %p272
    %p274 = scmp.ne.s32.totalorder %s266, %s269
    %p275 = scmp.eq.s32.totalorder %s20, 0
    %p276 = por %p274, %p275
    %p277 = scmp.ne.s32.totalorder %s266, %s269
    %p278 = scmp.eq.s32.totalorder %s25, 1
    %p279 = por %p277, %p278
    %p280 = scmp.ne.s32.totalorder %s269, %s270
    %p281 = scmp.eq.s32.totalorder %s25, 0
    %p282 = por %p280, %p281
    %p283 = scmp.ne.s32.totalorder %s269, %s270
    %p284 = scmp.eq.s32.totalorder %s26, 1
    %p285 = por %p283, %p284
    %p287 = scmp.ne.s32.totalorder %s270, %s286
    %p288 = scmp.eq.s32.totalorder %s26, 0
    %p289 = por %p287, %p288
    %s290 = ssub.s32 %s20, %s27
    %p291 = scmp.eq.s32.totalorder %s290, 0
    %s293 = sadd.s32 %s292, 1
    %s294 = scalar_select %p291, %s292, %s293
    %p297 = pneg %p291
    %p298 = scmp.eq.s32.totalorder %s20, 1
    %p299 = por %p297, %p298
    %p300 = scmp.ne.s32.totalorder %s292, %s295
    %p301 = scmp.eq.s32.totalorder %s20, 0
    %p302 = por %p300, %p301
    %p303 = scmp.ne.s32.totalorder %s292, %s295
    %p304 = scmp.eq.s32.totalorder %s25, 1
    %p305 = por %p303, %p304
    %p306 = scmp.ne.s32.totalorder %s295, %s296
    %p307 = scmp.eq.s32.totalorder %s25, 0
    %p308 = por %p306, %p307
    %p309 = scmp.ne.s32.totalorder %s295, %s296
    %p310 = scmp.eq.s32.totalorder %s26, 1
    %p311 = por %p309, %p310
    %p313 = scmp.ne.s32.totalorder %s296, %s312
    %p314 = scmp.eq.s32.totalorder %s26, 0
    %p315 = por %p313, %p314
    %s316 = ssub.s32 %s20, %s27
    %p317 = scmp.eq.s32.totalorder %s316, 0
    %s319 = sadd.s32 %s318, 1
    %s320 = scalar_select %p317, %s318, %s319
    %p323 = pneg %p317
    %p324 = scmp.eq.s32.totalorder %s20, 1
    %p325 = por %p323, %p324
    %p326 = scmp.ne.s32.totalorder %s318, %s321
    %p327 = scmp.eq.s32.totalorder %s20, 0
    %p328 = por %p326, %p327
    %p329 = scmp.ne.s32.totalorder %s318, %s321
    %p330 = scmp.eq.s32.totalorder %s25, 1
    %p331 = por %p329, %p330
    %p332 = scmp.ne.s32.totalorder %s321, %s322
    %p333 = scmp.eq.s32.totalorder %s25, 0
    %p334 = por %p332, %p333
    %p335 = scmp.ne.s32.totalorder %s321, %s322
    %p336 = scmp.eq.s32.totalorder %s26, 1
    %p337 = por %p335, %p336
    %p339 = scmp.ne.s32.totalorder %s322, %s338
    %p340 = scmp.eq.s32.totalorder %s26, 0
    %p341 = por %p339, %p340
    %p342 = scmp.le.s32.totalorder 1, %s20
    %p343 = scmp.lt.s32.totalorder %s20, 3
    %p344 = pnand %p342, %p343
    %p345 = pneg %p344
    // Predicated region
    $region9: #{backbone_module_forward.1} parent=5 // pred_check
      _
    $region10: #{backbone_module_forward.1} parent=5 // pred_check_branch
      %347 = sbr.rel (%p344) target = $region12
    $region11: #{backbone_module_forward.1} parent=5 // pred_region
      %s348 = ssub.s32 %s20, 1
      // Predicated region
      $region13: #{backbone_module_forward.1} parent=11 // pred_check
        %p349 = pneg %p41
      $region14: #{backbone_module_forward.1} parent=11 // pred_check_branch
        %351 = sbr.rel (%p349) target = $region16
      $region15: #{backbone_module_forward.1} parent=11 // pred_region
        _
      $region16: #{backbone_module_forward.1} parent=11 // pred_fallthru
        _
      // Predicated region
      $region17: #{backbone_module_forward.1} parent=11 // pred_check
        %p352 = pneg %p62
      $region18: #{backbone_module_forward.1} parent=11 // pred_check_branch
        %354 = sbr.rel (%p352) target = $region20
      $region19: #{backbone_module_forward.1} parent=11 // pred_region
        _
      $region20: #{backbone_module_forward.1} parent=11 // pred_fallthru
        _
      // Predicated region
      $region21: #{backbone_module_forward.1} parent=11 // pred_check
        %p355 = pneg %p109
      $region22: #{backbone_module_forward.1} parent=11 // pred_check_branch
        %357 = sbr.rel (%p355) target = $region24
      $region23: #{backbone_module_forward.1} parent=11 // pred_region
        _
      $region24: #{backbone_module_forward.1} parent=11 // pred_fallthru
        _
      // Predicated region
      $region25: #{backbone_module_forward.1} parent=11 // pred_check
        %p358 = pneg %p130
      $region26: #{backbone_module_forward.1} parent=11 // pred_check_branch
        %360 = sbr.rel (%p358) target = $region28
      $region27: #{backbone_module_forward.1} parent=11 // pred_region
        _
      $region28: #{backbone_module_forward.1} parent=11 // pred_fallthru
        _
      // Predicated region
      $region29: #{backbone_module_forward.1} parent=11 // pred_check
        %p361 = pneg %p151
      $region30: #{backbone_module_forward.1} parent=11 // pred_check_branch
        %363 = sbr.rel (%p361) target = $region32
      $region31: #{backbone_module_forward.1} parent=11 // pred_region
        _
      $region32: #{backbone_module_forward.1} parent=11 // pred_fallthru
        _
      // Predicated region
      $region33: #{backbone_module_forward.1} parent=11 // pred_check
        %p364 = pneg %p172
      $region34: #{backbone_module_forward.1} parent=11 // pred_check_branch
        %366 = sbr.rel (%p364) target = $region36
      $region35: #{backbone_module_forward.1} parent=11 // pred_region
        _
      $region36: #{backbone_module_forward.1} parent=11 // pred_fallthru
        _
      // Predicated region
      $region37: #{backbone_module_forward.1} parent=11 // pred_check
        %p367 = pneg %p193
      $region38: #{backbone_module_forward.1} parent=11 // pred_check_branch
        %369 = sbr.rel (%p367) target = $region40
      $region39: #{backbone_module_forward.1} parent=11 // pred_region
        _
      $region40: #{backbone_module_forward.1} parent=11 // pred_fallthru
        _
      // Predicated region
      $region41: #{backbone_module_forward.1} parent=11 // pred_check
        %p370 = pneg %p214
      $region42: #{backbone_module_forward.1} parent=11 // pred_check_branch
        %372 = sbr.rel (%p370) target = $region44
      $region43: #{backbone_module_forward.1} parent=11 // pred_region
        _
      $region44: #{backbone_module_forward.1} parent=11 // pred_fallthru
        _
      // Predicated region
      $region45: #{backbone_module_forward.1} parent=11 // pred_check
        %p373 = pneg %p235
      $region46: #{backbone_module_forward.1} parent=11 // pred_check_branch
        %375 = sbr.rel (%p373) target = $region48
      $region47: #{backbone_module_forward.1} parent=11 // pred_region
        _
      $region48: #{backbone_module_forward.1} parent=11 // pred_fallthru
        _
      // Predicated region
      $region49: #{backbone_module_forward.1} parent=11 // pred_check
        %p376 = pneg %p256
      $region50: #{backbone_module_forward.1} parent=11 // pred_check_branch
        %378 = sbr.rel (%p376) target = $region52
      $region51: #{backbone_module_forward.1} parent=11 // pred_region
        _
      $region52: #{backbone_module_forward.1} parent=11 // pred_fallthru
        _
    $region12: #{backbone_module_forward.1} parent=5 // pred_fallthru
      _
    %p379 = scmp.lt.s32.totalorder %s20, 2
    // Predicated region
    $region53: #{backbone_module_forward.1} parent=5 // pred_check
      %p380 = pneg %p379
    $region54: #{backbone_module_forward.1} parent=5 // pred_check_branch
      %382 = sbr.rel (%p380) target = $region56
    $region55: #{backbone_module_forward.1} parent=5 // pred_region
      // Predicated region
      $region57: #{backbone_module_forward.1} parent=55 // pred_check
        %p383 = pneg %p82
      $region58: #{backbone_module_forward.1} parent=55 // pred_check_branch
        %385 = sbr.rel (%p383) target = $region60
      $region59: #{backbone_module_forward.1} parent=55 // pred_region
        %p386 = scmp.lt.s32.totalorder %s20, 1
        %s387 = scalar_select %p386, %s20, 1
        %s388 = smul.addr %s387, 4
        %s389 = smul.addr %s388, 4
        %s390 = scalar_lea.vmem %s2, %s389
      $region60: #{backbone_module_forward.1} parent=55 // pred_fallthru
        _
    $region56: #{backbone_module_forward.1} parent=5 // pred_fallthru
      _
    %p391 = scmp.le.s32.totalorder 1, %s20
    %p392 = scmp.lt.s32.totalorder %s20, 3
    %p393 = pnand %p391, %p392
    %p394 = pneg %p393
    // Predicated region
    $region61: #{backbone_module_forward.1} parent=5 // pred_check
      _
    $region62: #{backbone_module_forward.1} parent=5 // pred_check_branch
      %396 = sbr.rel (%p393) target = $region64
    $region63: #{backbone_module_forward.1} parent=5 // pred_region
      %s397 = ssub.s32 %s20, 1
      %p398 = pneg %p41
      %p399 = pneg %p38
      %p400 = pneg %p62
      %p401 = pneg %p59
      %p402 = scmp.lt.s32.totalorder %s25, 1
      %s403 = scalar_select %p402, %s25, 1
      %s404 = smul.addr %s403, 4
      %s405 = smul.addr %s404, 4
      %s406 = scalar_lea.vmem %s2, %s405
      %p407 = pneg %p88
      %p408 = pneg %p85
      %p409 = pneg %p109
      %p410 = pneg %p106
      %p411 = pneg %p130
      %p412 = pneg %p127
      %p413 = pneg %p151
      %p414 = pneg %p148
      %p415 = pneg %p172
      %p416 = pneg %p169
      %p417 = pneg %p193
      %p418 = pneg %p190
      %p419 = pneg %p214
      %p420 = pneg %p211
      %p421 = pneg %p235
      %p422 = pneg %p232
      %p423 = pneg %p256
      %p424 = pneg %p253
      %p425 = pneg %p282
      %p426 = pneg %p279
      %p427 = scmp.lt.s32.totalorder %s25, 1
      %s428 = scalar_select %p427, %s25, 1
      %s429 = smul.addr %s428, 4
      %s430 = smul.addr %s429, 8
      %s431 = scalar_lea.vmem %s11, %s430
      %p432 = pneg %p308
      %p433 = pneg %p305
      %p434 = scmp.lt.s32.totalorder %s25, 1
      %s435 = scalar_select %p434, %s25, 1
      %s436 = smul.addr %s435, 2
      %s437 = smul.addr %s436, 8
      %s438 = scalar_lea.vmem %s12, %s437
      %p439 = pneg %p334
      %p440 = pneg %p331
      %p441 = scmp.lt.s32.totalorder %s25, 1
      %s442 = scalar_select %p441, %s25, 1
      %s443 = smul.addr %s442, 4
      %s444 = smul.addr %s443, 8
      %s445 = scalar_lea.vmem %s13, %s444
      %p446 = scmp.lt.s32.totalorder %s25, 1
      %s447 = scalar_select %p446, %s25, 1
      %s448 = smul.addr %s447, 4
      %s449 = smul.addr %s448, 4
      %s450 = scalar_lea.vmem %s2, %s449
      %p451 = scmp.lt.s32.totalorder %s25, 1
      %s452 = scalar_select %p451, %s25, 1
      %s453 = smul.addr %s452, 4
      %s454 = smul.addr %s453, 8
      %s455 = scalar_lea.vmem %s11, %s454
      %p456 = scmp.lt.s32.totalorder %s25, 1
      %s457 = scalar_select %p456, %s25, 1
      %s458 = smul.addr %s457, 2
      %s459 = smul.addr %s458, 8
      %s460 = scalar_lea.vmem %s12, %s459
      %p461 = scmp.lt.s32.totalorder %s25, 1
      %s462 = scalar_select %p461, %s25, 1
      %s463 = smul.addr %s462, 4
      %s464 = smul.addr %s463, 8
      %s465 = scalar_lea.vmem %s13, %s464
      %s466 = smul.u32 %s25, 2
      %s467 = scalar_lea.vmem %s0, %s466
      %v468 = vld [vmem:[%s467] sm:$0x3]
      %v469 = vld [vmem:[%s1] sm:$0xff]
      %v470 = vld [vmem:[%s1 + $0x8] sm:$0xff]
      %s472 = vtos %v468
      %v473 = vstv %s472
      %v475 = vmul.f32 %v473, %v469
      %v476 = vmul.f32 %v473, %v470
      %v477 = vld [vmem:[%s450] sm:$0xff]
      %v478 = vld [vmem:[%s450 + $0x8] sm:$0xff]
      %v479 = vrot.slane %v468, 1
      %s480 = vtos %v479
      %v481 = vstv %s480
      %v483 = vmul.f32 %v481, %v477
      %v484 = vmul.f32 %v481, %v478
      %v485 = vadd.f32 %v475, %v483
      %v486 = vadd.f32 %v476, %v484
      %v487 = vld [vmem:[%s3] sm:$0xff]
      %s488 = smul.u32 %s25, 8
      %s489 = scalar_lea.vmem %s4, %s488
      %v490 = vld [vmem:[%s489] sm:$0xff]
      %492 = vset.pattern.permute.xlu0 0
      %493 = vperm.xlu0 %492, %v490
      %v494 = vpop.permute.xlu0 %493
      %498 = vst [vmem:[#allocation1] ss:$2 sm:$0xff] %v485
      %s499 = scalar_lea.vmem [#allocation1], 16
      %500 = vst [vmem:[%s499] ss:$2 sm:$0xff] %v486
      %v501 = vld.sshfl [vmem:[#allocation1] sm:$0xff pattern:$0x75316420]
      %v502 = vld.sshfl [vmem:[#allocation1 + $0x8] sm:$0xff pattern:$0x75316420]
      %v503 = vld.sshfl [vmem:[#allocation1 + $0x10] sm:$0xff pattern:$0x75316420]
      %v504 = vld.sshfl [vmem:[#allocation1 + $0x18] sm:$0xff pattern:$0x75316420]
      %vm505 = vcmask 31744
      %v507 = vsel %vm505, %v487, 0
      %vm509 = vcmask 1043456
      %v510 = vsel %vm509, %v501, 0
      %v512 = vsel %vm509, %v502, 0
      %v514 = vsel %vm509, %v503, 0
      %v516 = vsel %vm509, %v504, 0
      %518 = vmatpush.msra.mxu0 0.0
      %519 = vmatpush.msra.mxu0 0.0
      %520 = vmatpush.msra.mxu0 0.0
      %521 = vmatpush.msra.mxu0 0.0
      %522 = vmatpush.msra.mxu0 0.0
      %523 = vmatpush.msra.mxu0 0.0
      %524 = vmatpush.msra.mxu0 0.0
      %525 = vmatpush.msra.mxu0 0.0
      %526 = vmatpush.msra.mxu0 0.0
      %527 = vmatpush.msra.mxu0 0.0
      %528 = vmatpush.msra.mxu0 0.0
      %529 = vmatpush.msra.mxu0 0.0
      %530 = vmatpush.msra.mxu0 0.0
      %531 = vmatpush.msra.mxu0 0.0
      %532 = vmatpush.msra.mxu0 0.0
      %533 = vmatpush.msra.mxu0 %v510
      %534 = vmatmul.f32.gmra.mxu0 %v507
      %v535 = vpop.f32.mrf.mxu0
      %v536 = vadd.f32 %v494, %v535
      %537 = vdwg.mxu0
      %538 = vmatpush.msra.mxu0 0.0
      %539 = vmatpush.msra.mxu0 0.0
      %540 = vmatpush.msra.mxu0 0.0
      %541 = vmatpush.msra.mxu0 0.0
      %542 = vmatpush.msra.mxu0 0.0
      %543 = vmatpush.msra.mxu0 0.0
      %544 = vmatpush.msra.mxu0 0.0
      %545 = vmatpush.msra.mxu0 0.0
      %546 = vmatpush.msra.mxu0 0.0
      %547 = vmatpush.msra.mxu0 0.0
      %548 = vmatpush.msra.mxu0 0.0
      %549 = vmatpush.msra.mxu0 0.0
      %550 = vmatpush.msra.mxu0 0.0
      %551 = vmatpush.msra.mxu0 0.0
      %552 = vmatpush.msra.mxu0 0.0
      %553 = vmatpush.msra.mxu0 %v512
      %554 = vmatmul.f32.gmra.mxu0 %v507
      %v555 = vpop.f32.mrf.mxu0
      %v556 = vadd.f32 %v494, %v555
      %557 = vdwg.mxu0
      %558 = vmatpush.msra.mxu0 0.0
      %559 = vmatpush.msra.mxu0 0.0
      %560 = vmatpush.msra.mxu0 0.0
      %561 = vmatpush.msra.mxu0 0.0
      %562 = vmatpush.msra.mxu0 0.0
      %563 = vmatpush.msra.mxu0 0.0
      %564 = vmatpush.msra.mxu0 0.0
      %565 = vmatpush.msra.mxu0 0.0
      %566 = vmatpush.msra.mxu0 0.0
      %567 = vmatpush.msra.mxu0 0.0
      %568 = vmatpush.msra.mxu0 0.0
      %569 = vmatpush.msra.mxu0 0.0
      %570 = vmatpush.msra.mxu0 0.0
      %571 = vmatpush.msra.mxu0 0.0
      %572 = vmatpush.msra.mxu0 0.0
      %573 = vmatpush.msra.mxu0 %v514
      %574 = vmatmul.f32.gmra.mxu0 %v507
      %v575 = vpop.f32.mrf.mxu0
      %v576 = vadd.f32 %v494, %v575
      %577 = vdwg.mxu0
      %578 = vmatpush.msra.mxu0 0.0
      %579 = vmatpush.msra.mxu0 0.0
      %580 = vmatpush.msra.mxu0 0.0
      %581 = vmatpush.msra.mxu0 0.0
      %582 = vmatpush.msra.mxu0 0.0
      %583 = vmatpush.msra.mxu0 0.0
      %584 = vmatpush.msra.mxu0 0.0
      %585 = vmatpush.msra.mxu0 0.0
      %586 = vmatpush.msra.mxu0 0.0
      %587 = vmatpush.msra.mxu0 0.0
      %588 = vmatpush.msra.mxu0 0.0
      %589 = vmatpush.msra.mxu0 0.0
      %590 = vmatpush.msra.mxu0 0.0
      %591 = vmatpush.msra.mxu0 0.0
      %592 = vmatpush.msra.mxu0 0.0
      %593 = vmatpush.msra.mxu0 %v516
      %594 = vmatmul.f32.gmra.mxu0 %v507
      %v595 = vpop.f32.mrf.mxu0
      %v596 = vadd.f32 %v494, %v595
      %597 = vdwg.mxu0
      %v598 = vmax.f32 %v536, 0.0
      %v599 = vmax.f32 %v556, 0.0
      %v600 = vmax.f32 %v576, 0.0
      %v601 = vmax.f32 %v596, 0.0
      %602 = vst [vmem:[%s455] sm:$0xff] %v598
      %603 = vst [vmem:[%s455 + $0x8] sm:$0xff] %v599
      %604 = vst [vmem:[%s455 + $0x10] sm:$0xff] %v600
      %605 = vst [vmem:[%s455 + $0x18] sm:$0xff] %v601
      %v606 = vld [vmem:[%s5] sm:$0xff]
      %v607 = vld [vmem:[%s5 + $0x8] sm:$0xff]
      %v608 = vld [vmem:[%s5 + $0x10] sm:$0xff]
      %v609 = vld [vmem:[%s5 + $0x18] sm:$0xff]
      %v610 = vld [vmem:[%s5 + $0x20] sm:$0xff]
      %v611 = vld [vmem:[%s5 + $0x28] sm:$0xff]
      %v612 = vld [vmem:[%s5 + $0x30] sm:$0xff]
      %v613 = vld [vmem:[%s5 + $0x38] sm:$0xff]
      %v614 = vld [vmem:[%s5 + $0x40] sm:$0xff]
      %v615 = vld [vmem:[%s5 + $0x48] sm:$0xff]
      %v616 = vld [vmem:[%s5 + $0x50] sm:$0xff]
      %v617 = vld [vmem:[%s5 + $0x58] sm:$0xff]
      %v618 = vld [vmem:[%s5 + $0x60] sm:$0xff]
      %v619 = vld [vmem:[%s5 + $0x68] sm:$0xff]
      %v620 = vld [vmem:[%s5 + $0x70] sm:$0xff]
      %v621 = vld [vmem:[%s5 + $0x78] sm:$0xff]
      %v622 = vld [vmem:[%s5 + $0x80] sm:$0xff]
      %v623 = vld [vmem:[%s5 + $0x88] sm:$0xff]
      %v624 = vld [vmem:[%s5 + $0x90] sm:$0xff]
      %v625 = vld [vmem:[%s5 + $0x98] sm:$0xff]
      %v626 = vld [vmem:[%s5 + $0xa0] sm:$0xff]
      %v627 = vld [vmem:[%s5 + $0xa8] sm:$0xff]
      %v628 = vld [vmem:[%s5 + $0xb0] sm:$0xff]
      %v629 = vld [vmem:[%s5 + $0xb8] sm:$0xff]
      %v630 = vld [vmem:[%s5 + $0xc0] sm:$0xff]
      %v631 = vld [vmem:[%s5 + $0xc8] sm:$0xff]
      %v632 = vld [vmem:[%s5 + $0xd0] sm:$0xff]
      %v633 = vld [vmem:[%s5 + $0xd8] sm:$0xff]
      %v634 = vld [vmem:[%s5 + $0xe0] sm:$0xff]
      %v635 = vld [vmem:[%s5 + $0xe8] sm:$0xff]
      %v636 = vld [vmem:[%s5 + $0xf0] sm:$0xff]
      %v637 = vld [vmem:[%s5 + $0xf8] sm:$0xff]
      %v638 = vld [vmem:[%s5 + $0x100] sm:$0xff]
      %v639 = vld [vmem:[%s5 + $0x108] sm:$0xff]
      %v640 = vld [vmem:[%s5 + $0x110] sm:$0xff]
      %v641 = vld [vmem:[%s5 + $0x118] sm:$0xff]
      %v642 = vld [vmem:[%s5 + $0x120] sm:$0xff]
      %v643 = vld [vmem:[%s5 + $0x128] sm:$0xff]
      %v644 = vld [vmem:[%s5 + $0x130] sm:$0xff]
      %v645 = vld [vmem:[%s5 + $0x138] sm:$0xff]
      %v646 = vld [vmem:[%s5 + $0x140] sm:$0xff]
      %v647 = vld [vmem:[%s5 + $0x148] sm:$0xff]
      %v648 = vld [vmem:[%s5 + $0x150] sm:$0xff]
      %v649 = vld [vmem:[%s5 + $0x158] sm:$0xff]
      %v650 = vld [vmem:[%s5 + $0x160] sm:$0xff]
      %v651 = vld [vmem:[%s5 + $0x168] sm:$0xff]
      %v652 = vld [vmem:[%s5 + $0x170] sm:$0xff]
      %v653 = vld [vmem:[%s5 + $0x178] sm:$0xff]
      %v654 = vld [vmem:[%s5 + $0x180] sm:$0xff]
      %v655 = vld [vmem:[%s5 + $0x188] sm:$0xff]
      %v656 = vld [vmem:[%s5 + $0x190] sm:$0xff]
      %v657 = vld [vmem:[%s5 + $0x198] sm:$0xff]
      %v658 = vld [vmem:[%s5 + $0x1a0] sm:$0xff]
      %v659 = vld [vmem:[%s5 + $0x1a8] sm:$0xff]
      %v660 = vld [vmem:[%s5 + $0x1b0] sm:$0xff]
      %v661 = vld [vmem:[%s5 + $0x1b8] sm:$0xff]
      %v662 = vld [vmem:[%s5 + $0x1c0] sm:$0xff]
      %v663 = vld [vmem:[%s5 + $0x1c8] sm:$0xff]
      %v664 = vld [vmem:[%s5 + $0x1d0] sm:$0xff]
      %v665 = vld [vmem:[%s5 + $0x1d8] sm:$0xff]
      %v666 = vld [vmem:[%s5 + $0x1e0] sm:$0xff]
      %v667 = vld [vmem:[%s5 + $0x1e8] sm:$0xff]
      %v668 = vld [vmem:[%s5 + $0x1f0] sm:$0xff]
      %v669 = vld [vmem:[%s5 + $0x1f8] sm:$0xff]
      %670 = vmatpush.msra.mxu0 %v621
      %671 = vmatpush.msra.mxu0 %v620
      %672 = vmatpush.msra.mxu0 %v619
      %673 = vmatpush.msra.mxu0 %v618
      %674 = vmatpush.msra.mxu0 %v617
      %675 = vmatpush.msra.mxu0 %v616
      %676 = vmatpush.msra.mxu0 %v615
      %677 = vmatpush.msra.mxu0 %v614
      %678 = vmatpush.msra.mxu0 %v613
      %679 = vmatpush.msra.mxu0 %v612
      %680 = vmatpush.msra.mxu0 %v611
      %681 = vmatpush.msra.mxu0 %v610
      %682 = vmatpush.msra.mxu0 %v609
      %683 = vmatpush.msra.mxu0 %v608
      %684 = vmatpush.msra.mxu0 %v607
      %685 = vmatpush.msra.mxu0 %v606
      %686 = vmatmul.f32.gmra.mxu0 %v598
      %v687 = vpop.f32.mrf.mxu0
      %v688 = vadd.f32 0.0, %v687
      %689 = vdwg.mxu0
      %690 = vmatpush.msra.mxu0 %v637
      %691 = vmatpush.msra.mxu0 %v636
      %692 = vmatpush.msra.mxu0 %v635
      %693 = vmatpush.msra.mxu0 %v634
      %694 = vmatpush.msra.mxu0 %v633
      %695 = vmatpush.msra.mxu0 %v632
      %696 = vmatpush.msra.mxu0 %v631
      %697 = vmatpush.msra.mxu0 %v630
      %698 = vmatpush.msra.mxu0 %v629
      %699 = vmatpush.msra.mxu0 %v628
      %700 = vmatpush.msra.mxu0 %v627
      %701 = vmatpush.msra.mxu0 %v626
      %702 = vmatpush.msra.mxu0 %v625
      %703 = vmatpush.msra.mxu0 %v624
      %704 = vmatpush.msra.mxu0 %v623
      %705 = vmatpush.msra.mxu0 %v622
      %706 = vmatmul.f32.gmra.mxu0 %v599
      %v707 = vpop.f32.mrf.mxu0
      %v708 = vadd.f32 %v688, %v707
      %709 = vdwg.mxu0
      %710 = vmatpush.msra.mxu0 %v653
      %711 = vmatpush.msra.mxu0 %v652
      %712 = vmatpush.msra.mxu0 %v651
      %713 = vmatpush.msra.mxu0 %v650
      %714 = vmatpush.msra.mxu0 %v649
      %715 = vmatpush.msra.mxu0 %v648
      %716 = vmatpush.msra.mxu0 %v647
      %717 = vmatpush.msra.mxu0 %v646
      %718 = vmatpush.msra.mxu0 %v645
      %719 = vmatpush.msra.mxu0 %v644
      %720 = vmatpush.msra.mxu0 %v643
      %721 = vmatpush.msra.mxu0 %v642
      %722 = vmatpush.msra.mxu0 %v641
      %723 = vmatpush.msra.mxu0 %v640
      %724 = vmatpush.msra.mxu0 %v639
      %725 = vmatpush.msra.mxu0 %v638
      %726 = vmatmul.f32.gmra.mxu0 %v600
      %v727 = vpop.f32.mrf.mxu0
      %v728 = vadd.f32 %v708, %v727
      %729 = vdwg.mxu0
      %730 = vmatpush.msra.mxu0 %v669
      %731 = vmatpush.msra.mxu0 %v668
      %732 = vmatpush.msra.mxu0 %v667
      %733 = vmatpush.msra.mxu0 %v666
      %734 = vmatpush.msra.mxu0 %v665
      %735 = vmatpush.msra.mxu0 %v664
      %736 = vmatpush.msra.mxu0 %v663
      %737 = vmatpush.msra.mxu0 %v662
      %738 = vmatpush.msra.mxu0 %v661
      %739 = vmatpush.msra.mxu0 %v660
      %740 = vmatpush.msra.mxu0 %v659
      %741 = vmatpush.msra.mxu0 %v658
      %742 = vmatpush.msra.mxu0 %v657
      %743 = vmatpush.msra.mxu0 %v656
      %744 = vmatpush.msra.mxu0 %v655
      %745 = vmatpush.msra.mxu0 %v654
      %746 = vmatmul.f32.gmra.mxu0 %v601
      %v747 = vpop.f32.mrf.mxu0
      %v748 = vadd.f32 %v728, %v747
      %749 = vdwg.mxu0
      %v750 = vld [vmem:[%s6] sm:$0xff]
      %v751 = vld [vmem:[%s6 + $0x8] sm:$0xff]
      %s752 = smul.u32 %s25, 16
      %s753 = scalar_lea.vmem %s7, %s752
      %v754 = vld [vmem:[%s753] sm:$0xff]
      %v755 = vld [vmem:[%s753 + $0x8] sm:$0xff]
      %757 = vset.pattern.permute.xlu0 0
      %758 = vperm.xlu0 %757, %v754
      %v759 = vpop.permute.xlu0 %758
      %762 = vset.pattern.permute.xlu0 0
      %763 = vperm.xlu0 %762, %v755
      %v764 = vpop.permute.xlu0 %763
      %vm766 = vcmask 64512
      %v768 = vsel %vm766, %v750, 0
      %v771 = vsel %vm766, %v751, 0
      %773 = vmatpush.msra.mxu0 0.0
      %774 = vmatpush.msra.mxu0 0.0
      %775 = vmatpush.msra.mxu0 0.0
      %776 = vmatpush.msra.mxu0 0.0
      %777 = vmatpush.msra.mxu0 0.0
      %778 = vmatpush.msra.mxu0 0.0
      %779 = vmatpush.msra.mxu0 0.0
      %780 = vmatpush.msra.mxu0 0.0
      %781 = vmatpush.msra.mxu0 0.0
      %782 = vmatpush.msra.mxu0 0.0
      %783 = vmatpush.msra.mxu0 0.0
      %784 = vmatpush.msra.mxu0 0.0
      %785 = vmatpush.msra.mxu0 0.0
      %786 = vmatpush.msra.mxu0 0.0
      %787 = vmatpush.msra.mxu0 0.0
      %788 = vmatpush.msra.mxu0 %v748
      %789 = vmatmul.f32.gmra.mxu0 %v768
      %v790 = vpop.f32.mrf.mxu0
      %v791 = vadd.f32 %v759, %v790
      %792 = vmatmul.f32.gmra.mxu0 %v771
      %v793 = vpop.f32.mrf.mxu0
      %v794 = vadd.f32 %v764, %v793
      %795 = vdwg.mxu0
      %v796 = vmax.f32 %v791, 0.0
      %v797 = vmax.f32 %v794, 0.0
      %798 = vst [vmem:[%s460] sm:$0xff] %v796
      %799 = vst [vmem:[%s460 + $0x8] sm:$0xff] %v797
      %v800 = vld [vmem:[%s8] sm:$0xff]
      %v801 = vld [vmem:[%s8 + $0x8] sm:$0xff]
      %v802 = vld [vmem:[%s8 + $0x10] sm:$0xff]
      %v803 = vld [vmem:[%s8 + $0x18] sm:$0xff]
      %v804 = vld [vmem:[%s8 + $0x20] sm:$0xff]
      %v805 = vld [vmem:[%s8 + $0x28] sm:$0xff]
      %v806 = vld [vmem:[%s8 + $0x30] sm:$0xff]
      %v807 = vld [vmem:[%s8 + $0x38] sm:$0xff]
      %v808 = vld [vmem:[%s8 + $0x40] sm:$0xff]
      %v809 = vld [vmem:[%s8 + $0x48] sm:$0xff]
      %v810 = vld [vmem:[%s8 + $0x50] sm:$0xff]
      %v811 = vld [vmem:[%s8 + $0x58] sm:$0xff]
      %v812 = vld [vmem:[%s8 + $0x60] sm:$0xff]
      %v813 = vld [vmem:[%s8 + $0x68] sm:$0xff]
      %v814 = vld [vmem:[%s8 + $0x70] sm:$0xff]
      %v815 = vld [vmem:[%s8 + $0x78] sm:$0xff]
      %816 = vmatpush.msra.mxu0 %v815
      %817 = vmatpush.msra.mxu0 %v814
      %818 = vmatpush.msra.mxu0 %v813
      %819 = vmatpush.msra.mxu0 %v812
      %820 = vmatpush.msra.mxu0 %v811
      %821 = vmatpush.msra.mxu0 %v810
      %822 = vmatpush.msra.mxu0 %v809
      %823 = vmatpush.msra.mxu0 %v808
      %824 = vmatpush.msra.mxu0 %v807
      %825 = vmatpush.msra.mxu0 %v806
      %826 = vmatpush.msra.mxu0 %v805
      %827 = vmatpush.msra.mxu0 %v804
      %828 = vmatpush.msra.mxu0 %v803
      %829 = vmatpush.msra.mxu0 %v802
      %830 = vmatpush.msra.mxu0 %v801
      %831 = vmatpush.msra.mxu0 %v800
      %832 = vmatmul.f32.gmra.mxu0 %v796
      %v833 = vpop.f32.mrf.mxu0
      %v834 = vadd.f32 0.0, %v833
      %835 = vmatmul.f32.gmra.mxu0 %v797
      %v836 = vpop.f32.mrf.mxu0
      %v837 = vadd.f32 0.0, %v836
      %838 = vdwg.mxu0
      %v839 = vld [vmem:[%s9] sm:$0xff]
      %v840 = vld [vmem:[%s9 + $0x8] sm:$0xff]
      %v841 = vld [vmem:[%s9 + $0x10] sm:$0xff]
      %v842 = vld [vmem:[%s9 + $0x18] sm:$0xff]
      %s843 = smul.u32 %s25, 32
      %s844 = scalar_lea.vmem %s10, %s843
      %v845 = vld [vmem:[%s844] sm:$0xff]
      %v846 = vld [vmem:[%s844 + $0x8] sm:$0xff]
      %v847 = vld [vmem:[%s844 + $0x10] sm:$0xff]
      %v848 = vld [vmem:[%s844 + $0x18] sm:$0xff]
      %850 = vset.pattern.permute.xlu0 0
      %851 = vperm.xlu0 %850, %v845
      %v852 = vpop.permute.xlu0 %851
      %855 = vset.pattern.permute.xlu0 0
      %856 = vperm.xlu0 %855, %v846
      %v857 = vpop.permute.xlu0 %856
      %860 = vset.pattern.permute.xlu0 0
      %861 = vperm.xlu0 %860, %v847
      %v862 = vpop.permute.xlu0 %861
      %865 = vset.pattern.permute.xlu0 0
      %866 = vperm.xlu0 %865, %v848
      %v867 = vpop.permute.xlu0 %866
      %vm869 = vcmask 130048
      %v871 = vsel %vm869, %v839, 0
      %v874 = vsel %vm869, %v840, 0
      %v877 = vsel %vm869, %v841, 0
      %v880 = vsel %vm869, %v842, 0
      %882 = vmatpush.msra.mxu0 0.0
      %883 = vmatpush.msra.mxu0 0.0
      %884 = vmatpush.msra.mxu0 0.0
      %885 = vmatpush.msra.mxu0 0.0
      %886 = vmatpush.msra.mxu0 0.0
      %887 = vmatpush.msra.mxu0 0.0
      %888 = vmatpush.msra.mxu0 0.0
      %889 = vmatpush.msra.mxu0 0.0
      %890 = vmatpush.msra.mxu0 0.0
      %891 = vmatpush.msra.mxu0 0.0
      %892 = vmatpush.msra.mxu0 0.0
      %893 = vmatpush.msra.mxu0 0.0
      %894 = vmatpush.msra.mxu0 0.0
      %895 = vmatpush.msra.mxu0 0.0
      %896 = vmatpush.msra.mxu0 %v837
      %897 = vmatpush.msra.mxu0 %v834
      %898 = vmatmul.f32.gmra.mxu0 %v871
      %v899 = vpop.f32.mrf.mxu0
      %v900 = vadd.f32 %v852, %v899
      %901 = vmatmul.f32.gmra.mxu0 %v874
      %v902 = vpop.f32.mrf.mxu0
      %v903 = vadd.f32 %v857, %v902
      %904 = vmatmul.f32.gmra.mxu0 %v877
      %v905 = vpop.f32.mrf.mxu0
      %v906 = vadd.f32 %v862, %v905
      %907 = vmatmul.f32.gmra.mxu0 %v880
      %v908 = vpop.f32.mrf.mxu0
      %v909 = vadd.f32 %v867, %v908
      %910 = vdwg.mxu0
      %v911 = vmax.f32 %v900, 0.0
      %v912 = vmax.f32 %v903, 0.0
      %v913 = vmax.f32 %v906, 0.0
      %v914 = vmax.f32 %v909, 0.0
      %vm915 = vcmask 261120
      %916 = vst.msk [vmem:[%s465] sm:$0xff] %vm915, %v911
      %917 = vst.msk [vmem:[%s465 + $0x8] sm:$0xff] %vm915, %v912
      %918 = vst.msk [vmem:[%s465 + $0x10] sm:$0xff] %vm915, %v913
      %919 = vst.msk [vmem:[%s465 + $0x18] sm:$0xff] %vm915, %v914
      %p920 = scmp.lt.s32.totalorder %s25, 1
      %s921 = scalar_select %p920, %s25, 1
      %s922 = smul.addr %s921, 4
      %s923 = smul.addr %s922, 8
      %s924 = scalar_lea.vmem %s11, %s923
      %p925 = scmp.lt.s32.totalorder %s25, 1
      %s926 = scalar_select %p925, %s25, 1
      %s927 = smul.addr %s926, 2
      %s928 = smul.addr %s927, 8
      %s929 = scalar_lea.vmem %s12, %s928
      %p930 = scmp.lt.s32.totalorder %s25, 1
      %s931 = scalar_select %p930, %s25, 1
      %s932 = smul.addr %s931, 4
      %s933 = smul.addr %s932, 8
      %s934 = scalar_lea.vmem %s13, %s933
      // Predicated region
      $region65: #{backbone_module_forward.1} parent=63 // pred_check
        %p935 = pneg %p279
      $region66: #{backbone_module_forward.1} parent=63 // pred_check_branch
        %937 = sbr.rel (%p935) target = $region68
      $region67: #{backbone_module_forward.1} parent=63 // pred_region
        _
      $region68: #{backbone_module_forward.1} parent=63 // pred_fallthru
        _
      // Predicated region
      $region69: #{backbone_module_forward.1} parent=63 // pred_check
        %p938 = pneg %p305
      $region70: #{backbone_module_forward.1} parent=63 // pred_check_branch
        %940 = sbr.rel (%p938) target = $region72
      $region71: #{backbone_module_forward.1} parent=63 // pred_region
        _
      $region72: #{backbone_module_forward.1} parent=63 // pred_fallthru
        _
      // Predicated region
      $region73: #{backbone_module_forward.1} parent=63 // pred_check
        %p941 = pneg %p331
      $region74: #{backbone_module_forward.1} parent=63 // pred_check_branch
        %943 = sbr.rel (%p941) target = $region76
      $region75: #{backbone_module_forward.1} parent=63 // pred_region
        _
      $region76: #{backbone_module_forward.1} parent=63 // pred_fallthru
        _
    $region64: #{backbone_module_forward.1} parent=5 // pred_fallthru
      _
    %p944 = scmp.le.s32.totalorder 2, %s20
    // Predicated region
    $region77: #{backbone_module_forward.1} parent=5 // pred_check
      %p945 = pneg %p944
    $region78: #{backbone_module_forward.1} parent=5 // pred_check_branch
      %947 = sbr.rel (%p945) target = $region80
    $region79: #{backbone_module_forward.1} parent=5 // pred_region
      %s948 = ssub.s32 %s20, 2
      // Predicated region
      $region81: #{backbone_module_forward.1} parent=79 // pred_check
        %p949 = pneg %p285
      $region82: #{backbone_module_forward.1} parent=79 // pred_check_branch
        %951 = sbr.rel (%p949) target = $region84
      $region83: #{backbone_module_forward.1} parent=79 // pred_region
        %p952 = scmp.lt.s32.totalorder %s26, 1
        %s953 = scalar_select %p952, %s26, 1
        %s954 = smul.addr %s953, 4
        %s955 = smul.addr %s954, 8
        %s956 = scalar_lea.vmem %s11, %s955
      $region84: #{backbone_module_forward.1} parent=79 // pred_fallthru
        _
      // Predicated region
      $region85: #{backbone_module_forward.1} parent=79 // pred_check
        %p957 = pneg %p311
      $region86: #{backbone_module_forward.1} parent=79 // pred_check_branch
        %959 = sbr.rel (%p957) target = $region88
      $region87: #{backbone_module_forward.1} parent=79 // pred_region
        %p960 = scmp.lt.s32.totalorder %s26, 1
        %s961 = scalar_select %p960, %s26, 1
        %s962 = smul.addr %s961, 2
        %s963 = smul.addr %s962, 8
        %s964 = scalar_lea.vmem %s12, %s963
      $region88: #{backbone_module_forward.1} parent=79 // pred_fallthru
        _
      // Predicated region
      $region89: #{backbone_module_forward.1} parent=79 // pred_check
        %p965 = pneg %p337
      $region90: #{backbone_module_forward.1} parent=79 // pred_check_branch
        %967 = sbr.rel (%p965) target = $region92
      $region91: #{backbone_module_forward.1} parent=79 // pred_region
        %p968 = scmp.lt.s32.totalorder %s26, 1
        %s969 = scalar_select %p968, %s26, 1
        %s970 = smul.addr %s969, 4
        %s971 = smul.addr %s970, 8
        %s972 = scalar_lea.vmem %s13, %s971
      $region92: #{backbone_module_forward.1} parent=79 // pred_fallthru
        _
    $region80: #{backbone_module_forward.1} parent=5 // pred_fallthru
      _
  $region6: #{backbone_module_forward.1} parent=0 // loop_footer
    %s24 = sadd.s32 1, %s20
  $region7: #{backbone_module_forward.1} parent=0 // loop_footer_branch
    %19 = sbr.rel target = $region3
  $region8: #{backbone_module_forward.1} parent=0 // loop_exit
    _

</llo_original>
